<compile_context>
chip_gen: v7x
topology: tpu7x:2x2x1
jax: 0.10.0
libtpu: 0.0.40
codegen_flags: <defaults>
</compile_context>

<pallas_src>
import functools

import jax
import jax.numpy as jnp
from jax.experimental import pallas as pl
from jax.experimental.pallas import tpu as pltpu


def _spatial_attention_kernel(xb_ref, xr_ref, ml_ref, w3_ref, mask_ref,
                              bs_ref, vs_ref, out_ref, *, block_b, n, t):
    # xb_ref  : (N, block_b*F*T)          x laid out as [i, (b, f, t)]
    # xr_ref  : (F*T, block_b*N)          x laid out as [(f, t), (b, j)]
    # ml_ref  : (block_b*F*T, block_b*T)  block-diagonal fused W1*W2 weight
    # w3_ref  : (T, F*T)                  W3 expanded with a time identity
    # mask_ref: (block_b*T, block_b*N)    0/1 block-diagonal batch mask
    # bs_ref  : (N, block_b*N)            bs tiled over the batch lanes
    # vs_ref  : (N, N)
    # out_ref : (N, block_b*N)            softmax result in [i, (b, j)] layout

    # lhs[b, i, t'] delivered directly in lane-dense [i, (b, t')] layout.
    lhs = jnp.dot(xb_ref[...], ml_ref[...],
                  preferred_element_type=jnp.float32)          # (N, bb*T)

    # rhs[b, j, t] in [t, (b, j)] layout.
    rhs_t = jnp.dot(w3_ref[...], xr_ref[...],
                    preferred_element_type=jnp.float32)        # (T, bb*N)

    # Block-diagonal expansion: rhs_bd[(b,t), (b',j)] = rhs[b',j,t] * delta(b,b').
    # (Sublane tile-aligned broadcast + one elementwise mask multiply.)
    rhs_rep = jnp.broadcast_to(rhs_t[None, :, :], (block_b, t, block_b * n))
    rhs_bd = rhs_rep.reshape(block_b * t, block_b * n) * mask_ref[...]

    # product[i, (b,j)] = sum_t lhs[b,i,t] * rhs[b,j,t] -- one MXU dot with a
    # lane-dense (block_b*N lanes) result for the whole VPU/EUP tail.
    product = jnp.dot(lhs, rhs_bd, preferred_element_type=jnp.float32)

    sig = jax.nn.sigmoid(product + bs_ref[...])                # (N, bb*N)

    # S[i, (b,j)] = sum_m Vs[i,m] * sig[m, (b,j)] -- a single dense MXU dot,
    # Vs pushed to the MXU once (no per-batch broadcast / tiny matmuls).
    s = jnp.dot(vs_ref[...], sig, preferred_element_type=jnp.float32)

    # softmax over the vertex axis i (torch Softmax(dim=1)) = sublane reduction.
    s_max = jnp.max(s, axis=0, keepdims=True)
    e = jnp.exp(s - s_max)
    denom = jnp.sum(e, axis=0, keepdims=True)
    # EUP approximate reciprocal + one Newton-Raphson step (near-f32 accuracy).
    inv = pl.reciprocal(denom, approx=True)
    inv = inv * (2.0 - denom * inv)
    out_ref[...] = (e * inv).astype(out_ref.dtype)


def _tensorcores_per_chip() -> int:
    """v7x exposes 2 TensorCores per chip; earlier generations expose 1."""
    try:
        kind = jax.devices()[0].device_kind.lower()
    except Exception:
        return 1
    return 2 if "7" in kind else 1


def spatial_attention(x, W1, W2, W3, bs, Vs, *, num_blocks=None):
    """Forward pass of Spatial_Attention_layer. x: (B, N, F, T) -> (B, N, N)."""
    B, N, F, T = x.shape
    f32 = jnp.float32
    x = x.astype(f32)
    W1 = W1.astype(f32)
    W2 = W2.astype(f32)
    W3 = W3.astype(f32)
    bs2d = bs.reshape(N, N).astype(f32)
    vs2d = Vs.astype(f32)

    # --- generation-aware batch blocking -------------------------------------
    # v5e/v6e: one grid step (whole batch, no per-step overhead, MXU fed once).
    # v7x:     two parallel grid steps so both TensorCores get a block.
    if num_blocks is None:
        num_blocks = 2 if (_tensorcores_per_chip() >= 2 and B >= 2) else 1
    block_b = -(-B // num_blocks)
    if num_blocks > 1 and not ((block_b * F * T) % 128 == 0
                               and (block_b * N) % 128 == 0):
        # Keep lane tiles aligned for the tiled specs; fall back to one block.
        num_blocks, block_b = 1, B
    b_pad = num_blocks * block_b

    # --- parameter-only fused operands (built once, VMEM-resident) -----------
    #   m_lhs[f*T+s, t'] = W1[s] * W2[f, t']     (lhs fused weight)
    m_lhs = (W2[:, None, :] * W1[None, :, None]).reshape(F * T, T)
    #   ml_bd[(b,f,s), (b',t')] = delta(b,b') * m_lhs[(f,s), t']
    ml_bd = jnp.kron(jnp.eye(block_b, dtype=f32), m_lhs)        # (bb*F*T, bb*T)
    #   w3mat[t, (f,s)] = W3[f] * delta(t, s)
    w3mat = (W3[None, :, None] *
             jnp.eye(T, dtype=f32)[:, None, :]).reshape(T, F * T)
    #   mask_bd[(b,t), (b',j)] = delta(b, b')
    mask_bd = jnp.kron(jnp.eye(block_b, dtype=f32),
                       jnp.ones((T, N), dtype=f32))             # (bb*T, bb*N)
    #   bs tiled over the batch lanes: bs_tiled[i, (b,j)] = bs[i, j]
    bs_tiled = jnp.tile(bs2d, (1, block_b))                     # (N, bb*N)

    # --- lane-dense input layouts (wrapper-side plumbing; x is tiny) ---------
    x_b = x.transpose(1, 0, 2, 3).reshape(N, B * F * T)         # [i, (b,f,t)]
    x_r = x.transpose(2, 3, 0, 1).reshape(F * T, B * N)         # [(f,t), (b,j)]
    if b_pad != B:
        x_b = jnp.pad(x_b, ((0, 0), (0, (b_pad - B) * F * T)))
        x_r = jnp.pad(x_r, ((0, 0), (0, (b_pad - B) * N)))

    kernel = functools.partial(_spatial_attention_kernel,
                               block_b=block_b, n=N, t=T)

    out2d = pl.pallas_call(
        kernel,
        out_shape=jax.ShapeDtypeStruct((N, b_pad * N), f32),
        grid_spec=pltpu.PrefetchScalarGridSpec(
            num_scalar_prefetch=0,
            grid=(num_blocks,),
            in_specs=[
                pl.BlockSpec((N, block_b * F * T), lambda g: (0, g)),
                pl.BlockSpec((F * T, block_b * N), lambda g: (0, g)),
                # Constant index maps: kept resident in VMEM across grid steps.
                pl.BlockSpec((block_b * F * T, block_b * T), lambda g: (0, 0)),
                pl.BlockSpec((T, F * T), lambda g: (0, 0)),
                pl.BlockSpec((block_b * T, block_b * N), lambda g: (0, 0)),
                pl.BlockSpec((N, block_b * N), lambda g: (0, 0)),
                pl.BlockSpec((N, N), lambda g: (0, 0)),
            ],
            out_specs=pl.BlockSpec((N, block_b * N), lambda g: (0, g)),
        ),
        compiler_params=pltpu.CompilerParams(
            dimension_semantics=("parallel",)),
    )(x_b, x_r, ml_bd, w3mat, mask_bd, bs_tiled, vs2d)

    # Lane-dense (N, b_pad*N) slab -> (B, N, N); pure wrapper-side layout work.
    out = out2d[:, :B * N].reshape(N, B, N).transpose(1, 0, 2)
    return out


def reference(x, W1, W2, W3, bs, Vs):
    # Pure-JAX mirror of the PyTorch forward for validation.
    lhs = jnp.einsum('bnft,t->bnf', x, W1) @ W2           # (B, N, T)
    rhs = jnp.einsum('f,bnft->bnt', W3, x)                # (B, N, T)
    product = jnp.einsum('bnt,bmt->bnm', lhs, rhs)        # (B, N, N)
    S = jnp.einsum('nm,bmk->bnk', Vs, jax.nn.sigmoid(product + bs))
    return jax.nn.softmax(S, axis=1)


if __name__ == "__main__":
    key = jax.random.PRNGKey(0)
    B, N, F, T = 16, 16, 4, 8   # batch, num_of_vertices, x_dim, num_of_timesteps
    kx, k1, k2, k3, kb, kv = jax.random.split(key, 6)

    x = jax.random.normal(kx, (B, N, F, T), dtype=jnp.float32)
    # Deterministic synthetic parameters (module.__init__ only declares shapes).
    W1 = jax.random.normal(k1, (T,), dtype=jnp.float32) * 0.1
    W2 = jax.random.normal(k2, (F, T), dtype=jnp.float32) * 0.1
    W3 = jax.random.normal(k3, (F,), dtype=jnp.float32) * 0.1
    bs = jax.random.normal(kb, (1, N, N), dtype=jnp.float32) * 0.1
    Vs = jax.random.normal(kv, (N, N), dtype=jnp.float32) * 0.1

    out = jax.block_until_ready(spatial_attention(x, W1, W2, W3, bs, Vs))
    ref = jax.block_until_ready(reference(x, W1, W2, W3, bs, Vs))

    assert out.shape == (B, N, N)
    # Approximate reciprocal (+1 NR step) in the softmax denominator -> 1e-4 tol.
    err = float(jnp.max(jnp.abs(out - ref)))
    assert jnp.allclose(out, ref, atol=1e-4, rtol=1e-4), err
    print("KERNEL_OK")
</pallas_src>

<mosaic_0001>
module attributes {stable_mosaic.version = 11 : i64} {
  func.func @_spatial_attention_kernel(%arg0: i32, %arg1: memref<16x512xf32, #tpu.memory_space<vmem>>, %arg2: memref<32x256xf32, #tpu.memory_space<vmem>>, %arg3: memref<512x128xf32, #tpu.memory_space<vmem>>, %arg4: memref<8x32xf32, #tpu.memory_space<vmem>>, %arg5: memref<128x256xf32, #tpu.memory_space<vmem>>, %arg6: memref<16x256xf32, #tpu.memory_space<vmem>>, %arg7: memref<16x16xf32, #tpu.memory_space<vmem>>, %arg8: memref<16x256xf32, #tpu.memory_space<vmem>>) attributes {dimension_semantics = [#tpu.dimension_semantics<parallel>], iteration_bounds = array<i64: 1>, scalar_prefetch = 0 : i64, scratch_operands = 0 : i64, tpu.core_type = #tpu.core_type<tc>, window_params = [{transform_indices = @transform_0, window_bounds = array<i64: 16, 512>}, {transform_indices = @transform_1, window_bounds = array<i64: 32, 256>}, {pipeline_mode = #tpu.pipeline_mode<synchronous>, transform_indices = @transform_2, window_bounds = array<i64: 512, 128>}, {pipeline_mode = #tpu.pipeline_mode<synchronous>, transform_indices = @transform_3, window_bounds = array<i64: 8, 32>}, {pipeline_mode = #tpu.pipeline_mode<synchronous>, transform_indices = @transform_4, window_bounds = array<i64: 128, 256>}, {pipeline_mode = #tpu.pipeline_mode<synchronous>, transform_indices = @transform_5, window_bounds = array<i64: 16, 256>}, {pipeline_mode = #tpu.pipeline_mode<synchronous>, transform_indices = @transform_6, window_bounds = array<i64: 16, 16>}, {transform_indices = @transform_7, window_bounds = array<i64: 16, 256>}]} {
    %c0 = arith.constant 0 : index
    %c0_0 = arith.constant 0 : index
    %0 = vector.load %arg1[%c0, %c0_0] : memref<16x512xf32, #tpu.memory_space<vmem>>, vector<16x512xf32>
    %c0_1 = arith.constant 0 : index
    %c0_2 = arith.constant 0 : index
    %1 = vector.load %arg3[%c0_1, %c0_2] : memref<512x128xf32, #tpu.memory_space<vmem>>, vector<512x128xf32>
    %cst = arith.constant dense<0.000000e+00> : vector<16x128xf32>
    %2 = tpu.matmul %0, %1, %cst {dimension_numbers = #tpu.dot_dimension_numbers<[1], [0], [0], [1], [0, 0, 1, 1], [], []>} : vector<16x512xf32>, vector<512x128xf32>, vector<16x128xf32> -> vector<16x128xf32>
    %c0_3 = arith.constant 0 : index
    %c0_4 = arith.constant 0 : index
    %3 = vector.load %arg4[%c0_3, %c0_4] : memref<8x32xf32, #tpu.memory_space<vmem>>, vector<8x32xf32>
    %c0_5 = arith.constant 0 : index
    %c0_6 = arith.constant 0 : index
    %4 = vector.load %arg2[%c0_5, %c0_6] : memref<32x256xf32, #tpu.memory_space<vmem>>, vector<32x256xf32>
    %cst_7 = arith.constant dense<0.000000e+00> : vector<8x256xf32>
    %5 = tpu.matmul %3, %4, %cst_7 {dimension_numbers = #tpu.dot_dimension_numbers<[1], [0], [0], [1], [0, 0, 1, 1], [], []>} : vector<8x32xf32>, vector<32x256xf32>, vector<8x256xf32> -> vector<8x256xf32>
    %6 = vector.shape_cast %5 : vector<8x256xf32> to vector<1x8x256xf32>
    %7 = vector.shape_cast %6 : vector<1x8x256xf32> to vector<1x8x256xf32>
    %8 = vector.broadcast %7 : vector<1x8x256xf32> to vector<16x8x256xf32>
    %9 = vector.shape_cast %8 : vector<16x8x256xf32> to vector<128x256xf32>
    %c0_8 = arith.constant 0 : index
    %c0_9 = arith.constant 0 : index
    %10 = vector.load %arg5[%c0_8, %c0_9] : memref<128x256xf32, #tpu.memory_space<vmem>>, vector<128x256xf32>
    %11 = arith.mulf %9, %10 : vector<128x256xf32>
    %cst_10 = arith.constant dense<0.000000e+00> : vector<16x256xf32>
    %12 = tpu.matmul %2, %11, %cst_10 {dimension_numbers = #tpu.dot_dimension_numbers<[1], [0], [0], [1], [0, 0, 1, 1], [], []>} : vector<16x128xf32>, vector<128x256xf32>, vector<16x256xf32> -> vector<16x256xf32>
    %c0_11 = arith.constant 0 : index
    %c0_12 = arith.constant 0 : index
    %13 = vector.load %arg6[%c0_11, %c0_12] : memref<16x256xf32, #tpu.memory_space<vmem>>, vector<16x256xf32>
    %14 = arith.addf %12, %13 : vector<16x256xf32>
    %15 = arith.negf %14 : vector<16x256xf32>
    %16 = math.exp %15 : vector<16x256xf32>
    %cst_13 = arith.constant 1.000000e+00 : f32
    %17 = vector.broadcast %cst_13 : f32 to vector<16x256xf32>
    %18 = arith.addf %17, %16 : vector<16x256xf32>
    %19 = arith.divf %17, %18 : vector<16x256xf32>
    %c0_14 = arith.constant 0 : index
    %c0_15 = arith.constant 0 : index
    %20 = vector.load %arg7[%c0_14, %c0_15] : memref<16x16xf32, #tpu.memory_space<vmem>>, vector<16x16xf32>
    %cst_16 = arith.constant dense<0.000000e+00> : vector<16x256xf32>
    %21 = tpu.matmul %20, %19, %cst_16 {dimension_numbers = #tpu.dot_dimension_numbers<[1], [0], [0], [1], [0, 0, 1, 1], [], []>} : vector<16x16xf32>, vector<16x256xf32>, vector<16x256xf32> -> vector<16x256xf32>
    %cst_17 = arith.constant dense<0xFF800000> : vector<256xf32>
    %22 = vector.multi_reduction <maximumf>, %21, %cst_17 [0] : vector<16x256xf32> to vector<256xf32>
    %23 = vector.shape_cast %22 : vector<256xf32> to vector<1x256xf32>
    %24 = vector.broadcast %23 : vector<1x256xf32> to vector<16x256xf32>
    %25 = arith.subf %21, %24 : vector<16x256xf32>
    %26 = math.exp %25 : vector<16x256xf32>
    %cst_18 = arith.constant dense<0.000000e+00> : vector<256xf32>
    %27 = vector.multi_reduction <add>, %26, %cst_18 [0] : vector<16x256xf32> to vector<256xf32>
    %28 = vector.shape_cast %27 : vector<256xf32> to vector<1x256xf32>
    %29 = tpu.reciprocal %28 {approx = true} : vector<1x256xf32> -> vector<1x256xf32>
    %30 = arith.mulf %28, %29 : vector<1x256xf32>
    %cst_19 = arith.constant 2.000000e+00 : f32
    %31 = vector.broadcast %cst_19 : f32 to vector<1x256xf32>
    %32 = arith.subf %31, %30 : vector<1x256xf32>
    %33 = arith.mulf %29, %32 : vector<1x256xf32>
    %34 = vector.broadcast %33 : vector<1x256xf32> to vector<16x256xf32>
    %35 = arith.mulf %26, %34 : vector<16x256xf32>
    %c0_20 = arith.constant 0 : index
    %c0_21 = arith.constant 0 : index
    %36 = vector.load %arg8[%c0_20, %c0_21] : memref<16x256xf32, #tpu.memory_space<vmem>>, vector<16x256xf32>
    tpu.vector_store %arg8[%c0_20, %c0_21], %35 {strides = array<i32>} : memref<16x256xf32, #tpu.memory_space<vmem>>, vector<16x256xf32>,
    return
  }
  func.func @transform_0(%arg0: i32) -> (i32, i32) {
    %c0_i32 = arith.constant 0 : i32
    %c0_i32_0 = arith.constant 0 : i32
    return %c0_i32, %arg0 : i32, i32
  }
  func.func @transform_1(%arg0: i32) -> (i32, i32) {
    %c0_i32 = arith.constant 0 : i32
    %c0_i32_0 = arith.constant 0 : i32
    return %c0_i32, %arg0 : i32, i32
  }
  func.func @transform_2(%arg0: i32) -> (i32, i32) {
    %c0_i32 = arith.constant 0 : i32
    %c0_i32_0 = arith.constant 0 : i32
    %c0_i32_1 = arith.constant 0 : i32
    return %c0_i32, %c0_i32_0 : i32, i32
  }
  func.func @transform_3(%arg0: i32) -> (i32, i32) {
    %c0_i32 = arith.constant 0 : i32
    %c0_i32_0 = arith.constant 0 : i32
    %c0_i32_1 = arith.constant 0 : i32
    return %c0_i32, %c0_i32_0 : i32, i32
  }
  func.func @transform_4(%arg0: i32) -> (i32, i32) {
    %c0_i32 = arith.constant 0 : i32
    %c0_i32_0 = arith.constant 0 : i32
    %c0_i32_1 = arith.constant 0 : i32
    return %c0_i32, %c0_i32_0 : i32, i32
  }
  func.func @transform_5(%arg0: i32) -> (i32, i32) {
    %c0_i32 = arith.constant 0 : i32
    %c0_i32_0 = arith.constant 0 : i32
    %c0_i32_1 = arith.constant 0 : i32
    return %c0_i32, %c0_i32_0 : i32, i32
  }
  func.func @transform_6(%arg0: i32) -> (i32, i32) {
    %c0_i32 = arith.constant 0 : i32
    %c0_i32_0 = arith.constant 0 : i32
    %c0_i32_1 = arith.constant 0 : i32
    return %c0_i32, %c0_i32_0 : i32, i32
  }
  func.func @transform_7(%arg0: i32) -> (i32, i32) {
    %c0_i32 = arith.constant 0 : i32
    %c0_i32_0 = arith.constant 0 : i32
    return %c0_i32, %arg0 : i32, i32
  }
}

</mosaic_0001>

<llo_original>
// kernel: tpu_custom_call.1
$region0: #{tpu_custom_call.1}
  #allocation0 [shape = 'u32[]', space=smem, size = 0x4, offset = 0x4, fixed_abs, tag = 'smem constant byte address 0x4 - core index']
  #allocation1 [shape = 'u32[144,128]{1,0:T(1,128)}', space=vmem, size = 0x12000, scoped, tag = 'internal scratch']
  %s0 = inlined_call_operand.hbm [shape: f32[16,512], index: 0, kind: input, shape index: {}]
  %s1 = inlined_call_operand.hbm [shape: f32[32,256], index: 1, kind: input, shape index: {}]
  %s2 = inlined_call_operand.hbm [shape: f32[512,128], index: 2, kind: input, shape index: {}]
  %s3 = inlined_call_operand.hbm [shape: f32[8,32], index: 3, kind: input, shape index: {}]
  %s4 = inlined_call_operand.hbm [shape: f32[128,256], index: 4, kind: input, shape index: {}]
  %s5 = inlined_call_operand.hbm [shape: f32[16,256], index: 5, kind: input, shape index: {}]
  %s6 = inlined_call_operand.vmem [shape: f32[16,16], index: 6, kind: input, shape index: {}]
  %s7 = inlined_call_operand.hbm [shape: f32[16,256], index: 7, kind: output, shape index: {}]
  %s8 = sld [smem:[#allocation0]]
  $region62: #{tpu_custom_call.1} parent=0
    _
  %s10 = ssub.s32 1, %s8
  %s11 = scalar_select 0, %s10, %s8
  $region1: #{tpu_custom_call.1} parent=0
    #allocation2 [shape = 'u8[32768]{0}', space=vmem, size = 0x8000, scoped, tag = 'input window, operand 0, single buffered']
    #allocation3 [shape = 's32[1]{0}', space=sflag, size = 0x4, scoped, tag = 'scoped memory for tpu_custom_call.1']
    #allocation4 [shape = 's32[1]{0}', space=sflag, size = 0x4, scoped, tag = 'scoped memory for tpu_custom_call.1']
    #allocation5 [shape = 'u8[32768]{0}', space=vmem, size = 0x8000, scoped, tag = 'input window, operand 1, single buffered']
    #allocation6 [shape = 's32[1]{0}', space=sflag, size = 0x4, scoped, tag = 'scoped memory for tpu_custom_call.1']
    #allocation7 [shape = 'u8[262144]{0}', space=vmem, size = 0x40000, scoped, tag = 'input window, operand 2, single buffered']
    #allocation8 [shape = 'u8[4096]{0}', space=vmem, size = 0x1000, scoped, tag = 'input window, operand 3, single buffered']
    #allocation9 [shape = 's32[1]{0}', space=sflag, size = 0x4, scoped, tag = 'scoped memory for tpu_custom_call.1']
    #allocation10 [shape = 'u8[131072]{0}', space=vmem, size = 0x20000, scoped, tag = 'input window, operand 4, single buffered']
    #allocation11 [shape = 'u8[16384]{0}', space=vmem, size = 0x4000, scoped, tag = 'input window, operand 5, single buffered']
    #allocation12 [shape = 's32[1]{0}', space=sflag, size = 0x4, scoped, tag = 'scoped memory for tpu_custom_call.1']
    #allocation13 [shape = 'u8[16384]{0}', space=vmem, size = 0x4000, scoped, tag = 'output window, operand 0, single buffered']
    %12 = vsyncpa [#allocation3], 0
    %13 = vsyncpa [#allocation6], 0
    %14 = vsyncpa [#allocation9], 0
    %15 = vsyncpa [#allocation12], 0
    %16 = vsyncpa [#allocation4], 0
    // Predicated region
    $region2: #{tpu_custom_call.1} parent=1 // pred_check
      _
    $region3: #{tpu_custom_call.1} parent=1 // pred_check_branch
      %18 = sbr.rel (0) target = $region5
    $region4: #{tpu_custom_call.1} parent=1 // pred_region
      %s20 = ssub.s32 1024, 1024
      %21 = vsyncadd [#allocation3], %s20
      %s22 = sshll.u32 [#allocation2], 4
      %s23 = int_to_ptr.vmem [resolvable:$true] %s22
      %28 = dma.hbm_to_vmem [thread:$0]  %s0, 1024, %s23, [#allocation3], 512, 512, 32
    $region5: #{tpu_custom_call.1} parent=1 // pred_fallthru
      _
    // Predicated region
    $region6: #{tpu_custom_call.1} parent=1 // pred_check
      _
    $region7: #{tpu_custom_call.1} parent=1 // pred_check_branch
      %30 = sbr.rel (0) target = $region9
    $region8: #{tpu_custom_call.1} parent=1 // pred_region
      %s32 = ssub.s32 1024, 1024
      %33 = vsyncadd [#allocation6], %s32
      %s34 = sshll.u32 [#allocation5], 4
      %s35 = int_to_ptr.vmem [resolvable:$true] %s34
      %40 = dma.hbm_to_vmem [thread:$0]  %s1, 1024, %s35, [#allocation6], 256, 256, 16
    $region9: #{tpu_custom_call.1} parent=1 // pred_fallthru
      _
    // Predicated region
    $region10: #{tpu_custom_call.1} parent=1 // pred_check
      _
    $region11: #{tpu_custom_call.1} parent=1 // pred_check_branch
      %42 = sbr.rel (0) target = $region13
    $region12: #{tpu_custom_call.1} parent=1 // pred_region
      %s44 = ssub.s32 8192, 8192
      %45 = vsyncadd [#allocation6], %s44
      %s46 = sshll.u32 [#allocation7], 4
      %s47 = int_to_ptr.vmem [resolvable:$true] %s46
      %52 = dma.hbm_to_vmem [thread:$0]  %s2, 8192, %s47, [#allocation6], 128, 128, 8
    $region13: #{tpu_custom_call.1} parent=1 // pred_fallthru
      _
    // Predicated region
    $region14: #{tpu_custom_call.1} parent=1 // pred_check
      _
    $region15: #{tpu_custom_call.1} parent=1 // pred_check_branch
      %54 = sbr.rel (0) target = $region17
    $region16: #{tpu_custom_call.1} parent=1 // pred_region
      %s56 = ssub.s32 128, 128
      %57 = vsyncadd [#allocation9], %s56
      %s59 = sshll.u32 [#allocation8], 4
      %s60 = int_to_ptr.vmem [resolvable:$true] %s59
      %62 = dma.hbm_to_vmem [thread:$0]  %s3, 128, %s60, [#allocation9]
    $region17: #{tpu_custom_call.1} parent=1 // pred_fallthru
      _
    // Predicated region
    $region18: #{tpu_custom_call.1} parent=1 // pred_check
      _
    $region19: #{tpu_custom_call.1} parent=1 // pred_check_branch
      %64 = sbr.rel (0) target = $region21
    $region20: #{tpu_custom_call.1} parent=1 // pred_region
      %s66 = ssub.s32 4096, 4096
      %67 = vsyncadd [#allocation9], %s66
      %s68 = sshll.u32 [#allocation10], 4
      %s69 = int_to_ptr.vmem [resolvable:$true] %s68
      %74 = dma.hbm_to_vmem [thread:$0]  %s4, 4096, %s69, [#allocation9], 256, 256, 16
    $region21: #{tpu_custom_call.1} parent=1 // pred_fallthru
      _
    // Predicated region
    $region22: #{tpu_custom_call.1} parent=1 // pred_check
      _
    $region23: #{tpu_custom_call.1} parent=1 // pred_check_branch
      %76 = sbr.rel (0) target = $region25
    $region24: #{tpu_custom_call.1} parent=1 // pred_region
      %s78 = ssub.s32 512, 512
      %79 = vsyncadd [#allocation12], %s78
      %s80 = sshll.u32 [#allocation11], 4
      %s81 = int_to_ptr.vmem [resolvable:$true] %s80
      %86 = dma.hbm_to_vmem [thread:$0]  %s5, 512, %s81, [#allocation12], 256, 256, 16
    $region25: #{tpu_custom_call.1} parent=1 // pred_fallthru
      _
    // Predicated region
    $region26: #{tpu_custom_call.1} parent=1 // pred_check
      _
    $region27: #{tpu_custom_call.1} parent=1 // pred_check_branch
      %88 = sbr.rel (0) target = $region29
    $region28: #{tpu_custom_call.1} parent=1 // pred_region
      _
    $region29: #{tpu_custom_call.1} parent=1 // pred_fallthru
      _
    // Predicated region
    $region30: #{tpu_custom_call.1} parent=1 // pred_check
      _
    $region31: #{tpu_custom_call.1} parent=1 // pred_check_branch
      %90 = sbr.rel (0) target = $region33
    $region32: #{tpu_custom_call.1} parent=1 // pred_region
      %91 = dma.done [#allocation3], 1024
    $region33: #{tpu_custom_call.1} parent=1 // pred_fallthru
      _
    // Predicated region
    $region34: #{tpu_custom_call.1} parent=1 // pred_check
      _
    $region35: #{tpu_custom_call.1} parent=1 // pred_check_branch
      %93 = sbr.rel (0) target = $region37
    $region36: #{tpu_custom_call.1} parent=1 // pred_region
      %94 = dma.done [#allocation6], 1024
    $region37: #{tpu_custom_call.1} parent=1 // pred_fallthru
      _
    // Predicated region
    $region38: #{tpu_custom_call.1} parent=1 // pred_check
      _
    $region39: #{tpu_custom_call.1} parent=1 // pred_check_branch
      %96 = sbr.rel (0) target = $region41
    $region40: #{tpu_custom_call.1} parent=1 // pred_region
      %97 = dma.done [#allocation6], 8192
    $region41: #{tpu_custom_call.1} parent=1 // pred_fallthru
      _
    // Predicated region
    $region42: #{tpu_custom_call.1} parent=1 // pred_check
      _
    $region43: #{tpu_custom_call.1} parent=1 // pred_check_branch
      %99 = sbr.rel (0) target = $region45
    $region44: #{tpu_custom_call.1} parent=1 // pred_region
      %100 = dma.done [#allocation9], 128
    $region45: #{tpu_custom_call.1} parent=1 // pred_fallthru
      _
    // Predicated region
    $region46: #{tpu_custom_call.1} parent=1 // pred_check
      _
    $region47: #{tpu_custom_call.1} parent=1 // pred_check_branch
      %102 = sbr.rel (0) target = $region49
    $region48: #{tpu_custom_call.1} parent=1 // pred_region
      %103 = dma.done [#allocation9], 4096
    $region49: #{tpu_custom_call.1} parent=1 // pred_fallthru
      _
    // Predicated region
    $region50: #{tpu_custom_call.1} parent=1 // pred_check
      _
    $region51: #{tpu_custom_call.1} parent=1 // pred_check_branch
      %105 = sbr.rel (0) target = $region53
    $region52: #{tpu_custom_call.1} parent=1 // pred_region
      %106 = dma.done [#allocation12], 512
    $region53: #{tpu_custom_call.1} parent=1 // pred_fallthru
      _
    %v107 = vld [vmem:[#allocation2] sm:$0xff]
    %v108 = vld [vmem:[#allocation2 + $0x8] sm:$0xff]
    %v109 = vld [vmem:[#allocation2 + $0x10] sm:$0xff]
    %v110 = vld [vmem:[#allocation2 + $0x18] sm:$0xff]
    %v111 = vld [vmem:[#allocation2 + $0x20] sm:$0xff]
    %v112 = vld [vmem:[#allocation2 + $0x28] sm:$0xff]
    %v113 = vld [vmem:[#allocation2 + $0x30] sm:$0xff]
    %v114 = vld [vmem:[#allocation2 + $0x38] sm:$0xff]
    %v115 = vld [vmem:[#allocation7] sm:$0xff]
    %v116 = vld [vmem:[#allocation7 + $0x8] sm:$0xff]
    %v117 = vld [vmem:[#allocation7 + $0x10] sm:$0xff]
    %v118 = vld [vmem:[#allocation7 + $0x18] sm:$0xff]
    %v119 = vld [vmem:[#allocation7 + $0x20] sm:$0xff]
    %v120 = vld [vmem:[#allocation7 + $0x28] sm:$0xff]
    %v121 = vld [vmem:[#allocation7 + $0x30] sm:$0xff]
    %v122 = vld [vmem:[#allocation7 + $0x38] sm:$0xff]
    %v123 = vld [vmem:[#allocation7 + $0x40] sm:$0xff]
    %v124 = vld [vmem:[#allocation7 + $0x48] sm:$0xff]
    %v125 = vld [vmem:[#allocation7 + $0x50] sm:$0xff]
    %v126 = vld [vmem:[#allocation7 + $0x58] sm:$0xff]
    %v127 = vld [vmem:[#allocation7 + $0x60] sm:$0xff]
    %v128 = vld [vmem:[#allocation7 + $0x68] sm:$0xff]
    %v129 = vld [vmem:[#allocation7 + $0x70] sm:$0xff]
    %v130 = vld [vmem:[#allocation7 + $0x78] sm:$0xff]
    %v131 = vld [vmem:[#allocation7 + $0x80] sm:$0xff]
    %v132 = vld [vmem:[#allocation7 + $0x88] sm:$0xff]
    %v133 = vld [vmem:[#allocation7 + $0x90] sm:$0xff]
    %v134 = vld [vmem:[#allocation7 + $0x98] sm:$0xff]
    %v135 = vld [vmem:[#allocation7 + $0xa0] sm:$0xff]
    %v136 = vld [vmem:[#allocation7 + $0xa8] sm:$0xff]
    %v137 = vld [vmem:[#allocation7 + $0xb0] sm:$0xff]
    %v138 = vld [vmem:[#allocation7 + $0xb8] sm:$0xff]
    %v139 = vld [vmem:[#allocation7 + $0xc0] sm:$0xff]
    %v140 = vld [vmem:[#allocation7 + $0xc8] sm:$0xff]
    %v141 = vld [vmem:[#allocation7 + $0xd0] sm:$0xff]
    %v142 = vld [vmem:[#allocation7 + $0xd8] sm:$0xff]
    %v143 = vld [vmem:[#allocation7 + $0xe0] sm:$0xff]
    %v144 = vld [vmem:[#allocation7 + $0xe8] sm:$0xff]
    %v145 = vld [vmem:[#allocation7 + $0xf0] sm:$0xff]
    %v146 = vld [vmem:[#allocation7 + $0xf8] sm:$0xff]
    %v147 = vld [vmem:[#allocation7 + $0x100] sm:$0xff]
    %v148 = vld [vmem:[#allocation7 + $0x108] sm:$0xff]
    %v149 = vld [vmem:[#allocation7 + $0x110] sm:$0xff]
    %v150 = vld [vmem:[#allocation7 + $0x118] sm:$0xff]
    %v151 = vld [vmem:[#allocation7 + $0x120] sm:$0xff]
    %v152 = vld [vmem:[#allocation7 + $0x128] sm:$0xff]
    %v153 = vld [vmem:[#allocation7 + $0x130] sm:$0xff]
    %v154 = vld [vmem:[#allocation7 + $0x138] sm:$0xff]
    %v155 = vld [vmem:[#allocation7 + $0x140] sm:$0xff]
    %v156 = vld [vmem:[#allocation7 + $0x148] sm:$0xff]
    %v157 = vld [vmem:[#allocation7 + $0x150] sm:$0xff]
    %v158 = vld [vmem:[#allocation7 + $0x158] sm:$0xff]
    %v159 = vld [vmem:[#allocation7 + $0x160] sm:$0xff]
    %v160 = vld [vmem:[#allocation7 + $0x168] sm:$0xff]
    %v161 = vld [vmem:[#allocation7 + $0x170] sm:$0xff]
    %v162 = vld [vmem:[#allocation7 + $0x178] sm:$0xff]
    %v163 = vld [vmem:[#allocation7 + $0x180] sm:$0xff]
    %v164 = vld [vmem:[#allocation7 + $0x188] sm:$0xff]
    %v165 = vld [vmem:[#allocation7 + $0x190] sm:$0xff]
    %v166 = vld [vmem:[#allocation7 + $0x198] sm:$0xff]
    %v167 = vld [vmem:[#allocation7 + $0x1a0] sm:$0xff]
    %v168 = vld [vmem:[#allocation7 + $0x1a8] sm:$0xff]
    %v169 = vld [vmem:[#allocation7 + $0x1b0] sm:$0xff]
    %v170 = vld [vmem:[#allocation7 + $0x1b8] sm:$0xff]
    %v171 = vld [vmem:[#allocation7 + $0x1c0] sm:$0xff]
    %v172 = vld [vmem:[#allocation7 + $0x1c8] sm:$0xff]
    %v173 = vld [vmem:[#allocation7 + $0x1d0] sm:$0xff]
    %v174 = vld [vmem:[#allocation7 + $0x1d8] sm:$0xff]
    %v175 = vld [vmem:[#allocation7 + $0x1e0] sm:$0xff]
    %v176 = vld [vmem:[#allocation7 + $0x1e8] sm:$0xff]
    %v177 = vld [vmem:[#allocation7 + $0x1f0] sm:$0xff]
    %v178 = vld [vmem:[#allocation7 + $0x1f8] sm:$0xff]
    %179 = vmatprep.subr.mxu0 0.0
    %180 = vmatpush1.msra.mxu0 %v115
    %181 = vmatprep.subr.mxu0 0.0
    %182 = vmatpush1.msra.mxu0 %v116
    %183 = vmatprep.subr.mxu0 0.0
    %184 = vmatpush1.msra.mxu0 %v117
    %185 = vmatprep.subr.mxu0 0.0
    %186 = vmatpush1.msra.mxu0 %v118
    %187 = vmatprep.subr.mxu0 0.0
    %188 = vmatpush1.msra.mxu0 %v119
    %189 = vmatprep.subr.mxu0 0.0
    %190 = vmatpush1.msra.mxu0 %v120
    %191 = vmatprep.subr.mxu0 0.0
    %192 = vmatpush1.msra.mxu0 %v121
    %193 = vmatprep.subr.mxu0 0.0
    %194 = vmatpush1.msra.mxu0 %v122
    %195 = vmatprep.subr.mxu0 0.0
    %196 = vmatpush1.msra.mxu0 %v123
    %197 = vmatprep.subr.mxu0 0.0
    %198 = vmatpush1.msra.mxu0 %v124
    %199 = vmatprep.subr.mxu0 0.0
    %200 = vmatpush1.msra.mxu0 %v125
    %201 = vmatprep.subr.mxu0 0.0
    %202 = vmatpush1.msra.mxu0 %v126
    %203 = vmatprep.subr.mxu0 0.0
    %204 = vmatpush1.msra.mxu0 %v127
    %205 = vmatprep.subr.mxu0 0.0
    %206 = vmatpush1.msra.mxu0 %v128
    %207 = vmatprep.subr.mxu0 0.0
    %208 = vmatpush1.msra.mxu0 %v129
    %209 = vmatprep.subr.mxu0 0.0
    %210 = vmatpush1.msra.mxu0 %v130
    %211 = vmatprep.subr.mxu0 0.0
    %212 = vmatpush1.msra.mxu0 %v131
    %213 = vmatprep.subr.mxu0 0.0
    %214 = vmatpush1.msra.mxu0 %v132
    %215 = vmatprep.subr.mxu0 0.0
    %216 = vmatpush1.msra.mxu0 %v133
    %217 = vmatprep.subr.mxu0 0.0
    %218 = vmatpush1.msra.mxu0 %v134
    %219 = vmatprep.subr.mxu0 0.0
    %220 = vmatpush1.msra.mxu0 %v135
    %221 = vmatprep.subr.mxu0 0.0
    %222 = vmatpush1.msra.mxu0 %v136
    %223 = vmatprep.subr.mxu0 0.0
    %224 = vmatpush1.msra.mxu0 %v137
    %225 = vmatprep.subr.mxu0 0.0
    %226 = vmatpush1.msra.mxu0 %v138
    %227 = vmatprep.subr.mxu0 0.0
    %228 = vmatpush1.msra.mxu0 %v139
    %229 = vmatprep.subr.mxu0 0.0
    %230 = vmatpush1.msra.mxu0 %v140
    %231 = vmatprep.subr.mxu0 0.0
    %232 = vmatpush1.msra.mxu0 %v141
    %233 = vmatprep.subr.mxu0 0.0
    %234 = vmatpush1.msra.mxu0 %v142
    %235 = vmatprep.subr.mxu0 0.0
    %236 = vmatpush1.msra.mxu0 %v143
    %237 = vmatprep.subr.mxu0 0.0
    %238 = vmatpush1.msra.mxu0 %v144
    %239 = vmatprep.subr.mxu0 0.0
    %240 = vmatpush1.msra.mxu0 %v145
    %241 = vmatprep.subr.mxu0 0.0
    %242 = vmatpush1.msra.mxu0 %v146
    %243 = vmatprep.mubr.f32.mxu0 %v108
    %244 = vmatmul.mubr.f32.gmra.mrb[0].mxu0 %v107
    %v245 = vpop.f32.mrb[0].mxu0
    %v246 = vadd.f32 0.0, %v245
    %v247 = vpop.f32.mrb[0].mxu0
    %248 = vmatprep.mubr.f32.mxu0 %v112
    %249 = vmatmul.mubr.f32.gmra.mrb[0].mxu0 %v111
    %v250 = vpop.f32.mrb[0].mxu0
    %v251 = vadd.f32 0.0, %v250
    %v252 = vpop.f32.mrb[0].mxu0
    %253 = vdwg.mxu0
    %254 = vmatprep.subr.mxu0 0.0
    %255 = vmatpush1.msra.mxu0 %v147
    %256 = vmatprep.subr.mxu0 0.0
    %257 = vmatpush1.msra.mxu0 %v148
    %258 = vmatprep.subr.mxu0 0.0
    %259 = vmatpush1.msra.mxu0 %v149
    %260 = vmatprep.subr.mxu0 0.0
    %261 = vmatpush1.msra.mxu0 %v150
    %262 = vmatprep.subr.mxu0 0.0
    %263 = vmatpush1.msra.mxu0 %v151
    %264 = vmatprep.subr.mxu0 0.0
    %265 = vmatpush1.msra.mxu0 %v152
    %266 = vmatprep.subr.mxu0 0.0
    %267 = vmatpush1.msra.mxu0 %v153
    %268 = vmatprep.subr.mxu0 0.0
    %269 = vmatpush1.msra.mxu0 %v154
    %270 = vmatprep.subr.mxu0 0.0
    %271 = vmatpush1.msra.mxu0 %v155
    %272 = vmatprep.subr.mxu0 0.0
    %273 = vmatpush1.msra.mxu0 %v156
    %274 = vmatprep.subr.mxu0 0.0
    %275 = vmatpush1.msra.mxu0 %v157
    %276 = vmatprep.subr.mxu0 0.0
    %277 = vmatpush1.msra.mxu0 %v158
    %278 = vmatprep.subr.mxu0 0.0
    %279 = vmatpush1.msra.mxu0 %v159
    %280 = vmatprep.subr.mxu0 0.0
    %281 = vmatpush1.msra.mxu0 %v160
    %282 = vmatprep.subr.mxu0 0.0
    %283 = vmatpush1.msra.mxu0 %v161
    %284 = vmatprep.subr.mxu0 0.0
    %285 = vmatpush1.msra.mxu0 %v162
    %286 = vmatprep.subr.mxu0 0.0
    %287 = vmatpush1.msra.mxu0 %v163
    %288 = vmatprep.subr.mxu0 0.0
    %289 = vmatpush1.msra.mxu0 %v164
    %290 = vmatprep.subr.mxu0 0.0
    %291 = vmatpush1.msra.mxu0 %v165
    %292 = vmatprep.subr.mxu0 0.0
    %293 = vmatpush1.msra.mxu0 %v166
    %294 = vmatprep.subr.mxu0 0.0
    %295 = vmatpush1.msra.mxu0 %v167
    %296 = vmatprep.subr.mxu0 0.0
    %297 = vmatpush1.msra.mxu0 %v168
    %298 = vmatprep.subr.mxu0 0.0
    %299 = vmatpush1.msra.mxu0 %v169
    %300 = vmatprep.subr.mxu0 0.0
    %301 = vmatpush1.msra.mxu0 %v170
    %302 = vmatprep.subr.mxu0 0.0
    %303 = vmatpush1.msra.mxu0 %v171
    %304 = vmatprep.subr.mxu0 0.0
    %305 = vmatpush1.msra.mxu0 %v172
    %306 = vmatprep.subr.mxu0 0.0
    %307 = vmatpush1.msra.mxu0 %v173
    %308 = vmatprep.subr.mxu0 0.0
    %309 = vmatpush1.msra.mxu0 %v174
    %310 = vmatprep.subr.mxu0 0.0
    %311 = vmatpush1.msra.mxu0 %v175
    %312 = vmatprep.subr.mxu0 0.0
    %313 = vmatpush1.msra.mxu0 %v176
    %314 = vmatprep.subr.mxu0 0.0
    %315 = vmatpush1.msra.mxu0 %v177
    %316 = vmatprep.subr.mxu0 0.0
    %317 = vmatpush1.msra.mxu0 %v178
    %318 = vmatprep.mubr.f32.mxu0 %v110
    %319 = vmatmul.mubr.f32.gmra.mrb[0].mxu0 %v109
    %v320 = vpop.f32.mrb[0].mxu0
    %v321 = vadd.f32 %v246, %v320
    %v322 = vpop.f32.mrb[0].mxu0
    %323 = vmatprep.mubr.f32.mxu0 %v114
    %324 = vmatmul.mubr.f32.gmra.mrb[0].mxu0 %v113
    %v325 = vpop.f32.mrb[0].mxu0
    %v326 = vadd.f32 %v251, %v325
    %v327 = vpop.f32.mrb[0].mxu0
    %328 = vdwg.mxu0
    %v329 = vld [vmem:[#allocation8] sm:$0xff]
    %v330 = vld [vmem:[#allocation5] sm:$0xff]
    %v331 = vld [vmem:[#allocation5 + $0x8] sm:$0xff]
    %v332 = vld [vmem:[#allocation5 + $0x10] sm:$0xff]
    %v333 = vld [vmem:[#allocation5 + $0x18] sm:$0xff]
    %v334 = vld [vmem:[#allocation5 + $0x20] sm:$0xff]
    %v335 = vld [vmem:[#allocation5 + $0x28] sm:$0xff]
    %v336 = vld [vmem:[#allocation5 + $0x30] sm:$0xff]
    %v337 = vld [vmem:[#allocation5 + $0x38] sm:$0xff]
    %vm338 = vcmask 261120
    %v340 = vsel %vm338, %v329, 0
    %342 = vmatprep.subr.mxu0 %v331
    %343 = vmatpush1.msra.mxu0 %v330
    %344 = vmatprep.subr.mxu0 %v333
    %345 = vmatpush1.msra.mxu0 %v332
    %346 = vmatprep.subr.mxu0 %v335
    %347 = vmatpush1.msra.mxu0 %v334
    %348 = vmatprep.subr.mxu0 %v337
    %349 = vmatpush1.msra.mxu0 %v336
    %350 = vmatprep.subr.mxu0 0.0
    %351 = vmatpush1.msra.mxu0 0.0
    %352 = vmatprep.subr.mxu0 0.0
    %353 = vmatpush1.msra.mxu0 0.0
    %354 = vmatprep.subr.mxu0 0.0
    %355 = vmatpush1.msra.mxu0 0.0
    %356 = vmatprep.subr.mxu0 0.0
    %357 = vmatpush1.msra.mxu0 0.0
    %358 = vmatprep.subr.mxu0 0.0
    %359 = vmatpush1.msra.mxu0 0.0
    %360 = vmatprep.subr.mxu0 0.0
    %361 = vmatpush1.msra.mxu0 0.0
    %362 = vmatprep.subr.mxu0 0.0
    %363 = vmatpush1.msra.mxu0 0.0
    %364 = vmatprep.subr.mxu0 0.0
    %365 = vmatpush1.msra.mxu0 0.0
    %366 = vmatprep.subr.mxu0 0.0
    %367 = vmatpush1.msra.mxu0 0.0
    %368 = vmatprep.subr.mxu0 0.0
    %369 = vmatpush1.msra.mxu0 0.0
    %370 = vmatprep.subr.mxu0 0.0
    %371 = vmatpush1.msra.mxu0 0.0
    %372 = vmatprep.subr.mxu0 0.0
    %373 = vmatpush1.msra.mxu0 0.0
    %374 = vmatprep.subr.mxu0 0.0
    %375 = vmatpush1.msra.mxu0 0.0
    %376 = vmatprep.subr.mxu0 0.0
    %377 = vmatpush1.msra.mxu0 0.0
    %378 = vmatprep.subr.mxu0 0.0
    %379 = vmatpush1.msra.mxu0 0.0
    %380 = vmatprep.subr.mxu0 0.0
    %381 = vmatpush1.msra.mxu0 0.0
    %382 = vmatprep.subr.mxu0 0.0
    %383 = vmatpush1.msra.mxu0 0.0
    %384 = vmatprep.subr.mxu0 0.0
    %385 = vmatpush1.msra.mxu0 0.0
    %386 = vmatprep.subr.mxu0 0.0
    %387 = vmatpush1.msra.mxu0 0.0
    %388 = vmatprep.subr.mxu0 0.0
    %389 = vmatpush1.msra.mxu0 0.0
    %390 = vmatprep.subr.mxu0 0.0
    %391 = vmatpush1.msra.mxu0 0.0
    %392 = vmatprep.subr.mxu0 0.0
    %393 = vmatpush1.msra.mxu0 0.0
    %394 = vmatprep.subr.mxu0 0.0
    %395 = vmatpush1.msra.mxu0 0.0
    %396 = vmatprep.subr.mxu0 0.0
    %397 = vmatpush1.msra.mxu0 0.0
    %398 = vmatprep.subr.mxu0 0.0
    %399 = vmatpush1.msra.mxu0 0.0
    %400 = vmatprep.subr.mxu0 0.0
    %401 = vmatpush1.msra.mxu0 0.0
    %402 = vmatprep.subr.mxu0 0.0
    %403 = vmatpush1.msra.mxu0 0.0
    %404 = vmatprep.subr.mxu0 0.0
    %405 = vmatpush1.msra.mxu0 0.0
    %406 = vmatprep.mubr.f32.mxu0 0.0
    %407 = vmatmul.mubr.f32.gmra.mrb[0].mxu0 %v340
    %v408 = vpop.f32.mrb[0].mxu0
    %v409 = vadd.f32 0.0, %v408
    %v410 = vpop.f32.mrb[0].mxu0
    %v411 = vadd.f32 0.0, %v410
    %412 = vdwg.mxu0
    %v413 = vld [vmem:[#allocation10] sm:$0xff]
    %v414 = vld [vmem:[#allocation10 + $0x8] sm:$0xff]
    %v415 = vld [vmem:[#allocation10 + $0x10] sm:$0xff]
    %v416 = vld [vmem:[#allocation10 + $0x18] sm:$0xff]
    %v417 = vld [vmem:[#allocation10 + $0x20] sm:$0xff]
    %v418 = vld [vmem:[#allocation10 + $0x28] sm:$0xff]
    %v419 = vld [vmem:[#allocation10 + $0x30] sm:$0xff]
    %v420 = vld [vmem:[#allocation10 + $0x38] sm:$0xff]
    %v421 = vld [vmem:[#allocation10 + $0x40] sm:$0xff]
    %v422 = vld [vmem:[#allocation10 + $0x48] sm:$0xff]
    %v423 = vld [vmem:[#allocation10 + $0x50] sm:$0xff]
    %v424 = vld [vmem:[#allocation10 + $0x58] sm:$0xff]
    %v425 = vld [vmem:[#allocation10 + $0x60] sm:$0xff]
    %v426 = vld [vmem:[#allocation10 + $0x68] sm:$0xff]
    %v427 = vld [vmem:[#allocation10 + $0x70] sm:$0xff]
    %v428 = vld [vmem:[#allocation10 + $0x78] sm:$0xff]
    %v429 = vld [vmem:[#allocation10 + $0x80] sm:$0xff]
    %v430 = vld [vmem:[#allocation10 + $0x88] sm:$0xff]
    %v431 = vld [vmem:[#allocation10 + $0x90] sm:$0xff]
    %v432 = vld [vmem:[#allocation10 + $0x98] sm:$0xff]
    %v433 = vld [vmem:[#allocation10 + $0xa0] sm:$0xff]
    %v434 = vld [vmem:[#allocation10 + $0xa8] sm:$0xff]
    %v435 = vld [vmem:[#allocation10 + $0xb0] sm:$0xff]
    %v436 = vld [vmem:[#allocation10 + $0xb8] sm:$0xff]
    %v437 = vld [vmem:[#allocation10 + $0xc0] sm:$0xff]
    %v438 = vld [vmem:[#allocation10 + $0xc8] sm:$0xff]
    %v439 = vld [vmem:[#allocation10 + $0xd0] sm:$0xff]
    %v440 = vld [vmem:[#allocation10 + $0xd8] sm:$0xff]
    %v441 = vld [vmem:[#allocation10 + $0xe0] sm:$0xff]
    %v442 = vld [vmem:[#allocation10 + $0xe8] sm:$0xff]
    %v443 = vld [vmem:[#allocation10 + $0xf0] sm:$0xff]
    %v444 = vld [vmem:[#allocation10 + $0xf8] sm:$0xff]
    %v445 = vmul.f32 %v409, %v413
    %v446 = vmul.f32 %v411, %v414
    %v447 = vmul.f32 %v409, %v415
    %v448 = vmul.f32 %v411, %v416
    %v449 = vmul.f32 %v409, %v417
    %v450 = vmul.f32 %v411, %v418
    %v451 = vmul.f32 %v409, %v419
    %v452 = vmul.f32 %v411, %v420
    %v453 = vmul.f32 %v409, %v421
    %v454 = vmul.f32 %v411, %v422
    %v455 = vmul.f32 %v409, %v423
    %v456 = vmul.f32 %v411, %v424
    %v457 = vmul.f32 %v409, %v425
    %v458 = vmul.f32 %v411, %v426
    %v459 = vmul.f32 %v409, %v427
    %v460 = vmul.f32 %v411, %v428
    %v461 = vmul.f32 %v409, %v429
    %v462 = vmul.f32 %v411, %v430
    %v463 = vmul.f32 %v409, %v431
    %v464 = vmul.f32 %v411, %v432
    %v465 = vmul.f32 %v409, %v433
    %v466 = vmul.f32 %v411, %v434
    %v467 = vmul.f32 %v409, %v435
    %v468 = vmul.f32 %v411, %v436
    %v469 = vmul.f32 %v409, %v437
    %v470 = vmul.f32 %v411, %v438
    %v471 = vmul.f32 %v409, %v439
    %v472 = vmul.f32 %v411, %v440
    %v473 = vmul.f32 %v409, %v441
    %v474 = vmul.f32 %v411, %v442
    %v475 = vmul.f32 %v409, %v443
    %v476 = vmul.f32 %v411, %v444
    %v477 = vld [vmem:[#allocation11] sm:$0xff]
    %v478 = vld [vmem:[#allocation11 + $0x8] sm:$0xff]
    %v479 = vld [vmem:[#allocation11 + $0x10] sm:$0xff]
    %v480 = vld [vmem:[#allocation11 + $0x18] sm:$0xff]
    %481 = vmatprep.subr.mxu0 %v446
    %482 = vmatpush1.msra.mxu0 %v445
    %483 = vmatprep.subr.mxu0 %v448
    %484 = vmatpush1.msra.mxu0 %v447
    %485 = vmatprep.subr.mxu0 %v450
    %486 = vmatpush1.msra.mxu0 %v449
    %487 = vmatprep.subr.mxu0 %v452
    %488 = vmatpush1.msra.mxu0 %v451
    %489 = vmatprep.subr.mxu0 %v454
    %490 = vmatpush1.msra.mxu0 %v453
    %491 = vmatprep.subr.mxu0 %v456
    %492 = vmatpush1.msra.mxu0 %v455
    %493 = vmatprep.subr.mxu0 %v458
    %494 = vmatpush1.msra.mxu0 %v457
    %495 = vmatprep.subr.mxu0 %v460
    %496 = vmatpush1.msra.mxu0 %v459
    %497 = vmatprep.subr.mxu0 %v462
    %498 = vmatpush1.msra.mxu0 %v461
    %499 = vmatprep.subr.mxu0 %v464
    %500 = vmatpush1.msra.mxu0 %v463
    %501 = vmatprep.subr.mxu0 %v466
    %502 = vmatpush1.msra.mxu0 %v465
    %503 = vmatprep.subr.mxu0 %v468
    %504 = vmatpush1.msra.mxu0 %v467
    %505 = vmatprep.subr.mxu0 %v470
    %506 = vmatpush1.msra.mxu0 %v469
    %507 = vmatprep.subr.mxu0 %v472
    %508 = vmatpush1.msra.mxu0 %v471
    %509 = vmatprep.subr.mxu0 %v474
    %510 = vmatpush1.msra.mxu0 %v473
    %511 = vmatprep.subr.mxu0 %v476
    %512 = vmatpush1.msra.mxu0 %v475
    %513 = vmatprep.subr.mxu0 0.0
    %514 = vmatpush1.msra.mxu0 0.0
    %515 = vmatprep.subr.mxu0 0.0
    %516 = vmatpush1.msra.mxu0 0.0
    %517 = vmatprep.subr.mxu0 0.0
    %518 = vmatpush1.msra.mxu0 0.0
    %519 = vmatprep.subr.mxu0 0.0
    %520 = vmatpush1.msra.mxu0 0.0
    %521 = vmatprep.subr.mxu0 0.0
    %522 = vmatpush1.msra.mxu0 0.0
    %523 = vmatprep.subr.mxu0 0.0
    %524 = vmatpush1.msra.mxu0 0.0
    %525 = vmatprep.subr.mxu0 0.0
    %526 = vmatpush1.msra.mxu0 0.0
    %527 = vmatprep.subr.mxu0 0.0
    %528 = vmatpush1.msra.mxu0 0.0
    %529 = vmatprep.subr.mxu0 0.0
    %530 = vmatpush1.msra.mxu0 0.0
    %531 = vmatprep.subr.mxu0 0.0
    %532 = vmatpush1.msra.mxu0 0.0
    %533 = vmatprep.subr.mxu0 0.0
    %534 = vmatpush1.msra.mxu0 0.0
    %535 = vmatprep.subr.mxu0 0.0
    %536 = vmatpush1.msra.mxu0 0.0
    %537 = vmatprep.subr.mxu0 0.0
    %538 = vmatpush1.msra.mxu0 0.0
    %539 = vmatprep.subr.mxu0 0.0
    %540 = vmatpush1.msra.mxu0 0.0
    %541 = vmatprep.subr.mxu0 0.0
    %542 = vmatpush1.msra.mxu0 0.0
    %543 = vmatprep.subr.mxu0 0.0
    %544 = vmatpush1.msra.mxu0 0.0
    %545 = vmatprep.mubr.f32.mxu0 0.0
    %546 = vmatmul.mubr.f32.gmra.mrb[0].mxu0 %v321
    %v547 = vpop.f32.mrb[0].mxu0
    %v548 = vadd.f32 %v477, %v547
    %v549 = vpop.f32.mrb[0].mxu0
    %v550 = vadd.f32 %v478, %v549
    %551 = vmatprep.mubr.f32.mxu0 0.0
    %552 = vmatmul.mubr.f32.gmra.mrb[0].mxu0 %v326
    %v553 = vpop.f32.mrb[0].mxu0
    %v554 = vadd.f32 %v479, %v553
    %v555 = vpop.f32.mrb[0].mxu0
    %v556 = vadd.f32 %v480, %v555
    %557 = vdwg.mxu0
    %v558 = vxor.u32 %v548, 2147483648
    %v559 = vxor.u32 %v550, 2147483648
    %v560 = vxor.u32 %v554, 2147483648
    %v561 = vxor.u32 %v556, 2147483648
    %v562 = vmul.f32 %v558, 1.442695
    %v563 = vpow.pop %v562
    %v564 = vmul.f32 %v559, 1.442695
    %v565 = vpow.pop %v564
    %v566 = vmul.f32 %v560, 1.442695
    %v567 = vpow.pop %v566
    %v568 = vmul.f32 %v561, 1.442695
    %v569 = vpow.pop %v568
    %v570 = vadd.f32 %v563, 1.0
    %v571 = vadd.f32 %v565, 1.0
    %v572 = vadd.f32 %v567, 1.0
    %v573 = vadd.f32 %v569, 1.0
    %v574 = vrcp.pop %v570
    %v575 = vmul.f32 1.0, %v574
    %v576 = vrcp.pop %v571
    %v577 = vmul.f32 1.0, %v576
    %v578 = vrcp.pop %v572
    %v579 = vmul.f32 1.0, %v578
    %v580 = vrcp.pop %v573
    %v581 = vmul.f32 1.0, %v580
    %v582 = vld [vmem:[%s6] sm:$0xff]
    %v583 = vld [vmem:[%s6 + $0x8] sm:$0xff]
    %vm584 = vcmask 130048
    %v586 = vsel %vm584, %v582, 0
    %v589 = vsel %vm584, %v583, 0
    %591 = vmatprep.subr.mxu0 %v577
    %592 = vmatpush1.msra.mxu0 %v575
    %593 = vmatprep.subr.mxu0 %v581
    %594 = vmatpush1.msra.mxu0 %v579
    %595 = vmatprep.subr.mxu0 0.0
    %596 = vmatpush1.msra.mxu0 0.0
    %597 = vmatprep.subr.mxu0 0.0
    %598 = vmatpush1.msra.mxu0 0.0
    %599 = vmatprep.subr.mxu0 0.0
    %600 = vmatpush1.msra.mxu0 0.0
    %601 = vmatprep.subr.mxu0 0.0
    %602 = vmatpush1.msra.mxu0 0.0
    %603 = vmatprep.subr.mxu0 0.0
    %604 = vmatpush1.msra.mxu0 0.0
    %605 = vmatprep.subr.mxu0 0.0
    %606 = vmatpush1.msra.mxu0 0.0
    %607 = vmatprep.subr.mxu0 0.0
    %608 = vmatpush1.msra.mxu0 0.0
    %609 = vmatprep.subr.mxu0 0.0
    %610 = vmatpush1.msra.mxu0 0.0
    %611 = vmatprep.subr.mxu0 0.0
    %612 = vmatpush1.msra.mxu0 0.0
    %613 = vmatprep.subr.mxu0 0.0
    %614 = vmatpush1.msra.mxu0 0.0
    %615 = vmatprep.subr.mxu0 0.0
    %616 = vmatpush1.msra.mxu0 0.0
    %617 = vmatprep.subr.mxu0 0.0
    %618 = vmatpush1.msra.mxu0 0.0
    %619 = vmatprep.subr.mxu0 0.0
    %620 = vmatpush1.msra.mxu0 0.0
    %621 = vmatprep.subr.mxu0 0.0
    %622 = vmatpush1.msra.mxu0 0.0
    %623 = vmatprep.subr.mxu0 0.0
    %624 = vmatpush1.msra.mxu0 0.0
    %625 = vmatprep.subr.mxu0 0.0
    %626 = vmatpush1.msra.mxu0 0.0
    %627 = vmatprep.subr.mxu0 0.0
    %628 = vmatpush1.msra.mxu0 0.0
    %629 = vmatprep.subr.mxu0 0.0
    %630 = vmatpush1.msra.mxu0 0.0
    %631 = vmatprep.subr.mxu0 0.0
    %632 = vmatpush1.msra.mxu0 0.0
    %633 = vmatprep.subr.mxu0 0.0
    %634 = vmatpush1.msra.mxu0 0.0
    %635 = vmatprep.subr.mxu0 0.0
    %636 = vmatpush1.msra.mxu0 0.0
    %637 = vmatprep.subr.mxu0 0.0
    %638 = vmatpush1.msra.mxu0 0.0
    %639 = vmatprep.subr.mxu0 0.0
    %640 = vmatpush1.msra.mxu0 0.0
    %641 = vmatprep.subr.mxu0 0.0
    %642 = vmatpush1.msra.mxu0 0.0
    %643 = vmatprep.subr.mxu0 0.0
    %644 = vmatpush1.msra.mxu0 0.0
    %645 = vmatprep.subr.mxu0 0.0
    %646 = vmatpush1.msra.mxu0 0.0
    %647 = vmatprep.subr.mxu0 0.0
    %648 = vmatpush1.msra.mxu0 0.0
    %649 = vmatprep.subr.mxu0 0.0
    %650 = vmatpush1.msra.mxu0 0.0
    %651 = vmatprep.subr.mxu0 0.0
    %652 = vmatpush1.msra.mxu0 0.0
    %653 = vmatprep.subr.mxu0 0.0
    %654 = vmatpush1.msra.mxu0 0.0
    %655 = vmatprep.mubr.f32.mxu0 0.0
    %656 = vmatmul.mubr.f32.gmra.mrb[0].mxu0 %v586
    %v657 = vpop.f32.mrb[0].mxu0
    %v658 = vadd.f32 0.0, %v657
    %v659 = vpop.f32.mrb[0].mxu0
    %v660 = vadd.f32 0.0, %v659
    %661 = vmatprep.mubr.f32.mxu0 0.0
    %662 = vmatmul.mubr.f32.gmra.mrb[0].mxu0 %v589
    %v663 = vpop.f32.mrb[0].mxu0
    %v664 = vadd.f32 0.0, %v663
    %v665 = vpop.f32.mrb[0].mxu0
    %v666 = vadd.f32 0.0, %v665
    %667 = vdwg.mxu0
    %v668 = vmax.f32 %v658, %v664
    %v669 = vrot.slane %v668, 4
    %v670 = vmax.f32 %v668, %v669
    %v671 = vrot.slane %v670, 2
    %v672 = vmax.f32 %v670, %v671
    %v673 = vrot.slane %v672, 1
    %v674 = vmax.f32 %v672, %v673
    %v675 = vmax.f32 %v660, %v666
    %v676 = vrot.slane %v675, 4
    %v677 = vmax.f32 %v675, %v676
    %v678 = vrot.slane %v677, 2
    %v679 = vmax.f32 %v677, %v678
    %v680 = vrot.slane %v679, 1
    %v681 = vmax.f32 %v679, %v680
    %v682 = vsub.f32 %v658, %v674
    %v683 = vsub.f32 %v660, %v681
    %v684 = vsub.f32 %v664, %v674
    %v685 = vsub.f32 %v666, %v681
    %v686 = vmul.f32 %v682, 1.442695
    %v687 = vpow.pop %v686
    %v688 = vmul.f32 %v683, 1.442695
    %v689 = vpow.pop %v688
    %v690 = vmul.f32 %v684, 1.442695
    %v691 = vpow.pop %v690
    %v692 = vmul.f32 %v685, 1.442695
    %v693 = vpow.pop %v692
    %v694 = vadd.f32 %v687, %v691
    %v695 = vrot.slane %v694, 4
    %v696 = vadd.f32 %v694, %v695
    %v697 = vrot.slane %v696, 2
    %v698 = vadd.f32 %v696, %v697
    %v699 = vrot.slane %v698, 1
    %v700 = vadd.f32 %v698, %v699
    %v701 = vadd.f32 %v689, %v693
    %v702 = vrot.slane %v701, 4
    %v703 = vadd.f32 %v701, %v702
    %v704 = vrot.slane %v703, 2
    %v705 = vadd.f32 %v703, %v704
    %v706 = vrot.slane %v705, 1
    %v707 = vadd.f32 %v705, %v706
    %v708 = vrcp.pop %v700
    %v709 = vrcp.pop %v707
    %v710 = vmul.f32 %v700, %v708
    %v711 = vmul.f32 %v707, %v709
    %v712 = vsub.f32 2.0, %v710
    %v713 = vsub.f32 2.0, %v711
    %v714 = vmul.f32 %v708, %v712
    %v715 = vmul.f32 %v709, %v713
    %v716 = vmul.f32 %v687, %v714
    %v717 = vmul.f32 %v689, %v715
    %v718 = vmul.f32 %v691, %v714
    %v719 = vmul.f32 %v693, %v715
    %720 = vst [vmem:[#allocation13] sm:$0xff] %v716
    %721 = vst [vmem:[#allocation13 + $0x8] sm:$0xff] %v717
    %722 = vst [vmem:[#allocation13 + $0x10] sm:$0xff] %v718
    %723 = vst [vmem:[#allocation13 + $0x18] sm:$0xff] %v719
    // Predicated region
    $region54: #{tpu_custom_call.1} parent=1 // pred_check
      _
    $region55: #{tpu_custom_call.1} parent=1 // pred_check_branch
      %725 = sbr.rel (0) target = $region57
    $region56: #{tpu_custom_call.1} parent=1 // pred_region
      %s727 = ssub.s32 512, 512
      %728 = vsyncadd [#allocation4], %s727
      %s729 = sshll.u32 [#allocation13], 4
      %s730 = int_to_ptr.vmem [resolvable:$true] %s729
      %735 = dma.vmem_to_hbm [thread:$0]  %s730, 512, %s7, [#allocation4], 256, 256, 16
    $region57: #{tpu_custom_call.1} parent=1 // pred_fallthru
      _
    // Predicated region
    $region58: #{tpu_custom_call.1} parent=1 // pred_check
      _
    $region59: #{tpu_custom_call.1} parent=1 // pred_check_branch
      %737 = sbr.rel (0) target = $region61
    $region60: #{tpu_custom_call.1} parent=1 // pred_region
      %738 = dma.done [#allocation4], 512
    $region61: #{tpu_custom_call.1} parent=1 // pred_fallthru
      _
    %739 = vsyncpa [#allocation3], 1
    %740 = vsyncpa [#allocation6], 1
    %741 = vsyncpa [#allocation9], 1
    %742 = vsyncpa [#allocation12], 1
    %743 = vsyncpa [#allocation4], 1

</llo_original>
